<compile_context>
chip_gen: v7x
topology: tpu7x:2x2x1
jax: 0.10.0
libtpu: 0.0.40
codegen_flags: <defaults>
</compile_context>

<pallas_src>
import jax
import jax.numpy as jnp
from jax.experimental import pallas as pl
from jax.experimental.pallas import tpu as pltpu


def _fused_linear_relu6_kernel(x_ref, w_ref, b_ref, o_ref):
    # x_ref : SMEM (1, 1)   f32  -- the single input activation (scalar path)
    # w_ref : VMEM (1, OUT) f32  -- weight laid out as a row at init time
    # b_ref : VMEM (1, OUT) f32  -- bias row
    # o_ref : VMEM (1, OUT) f32
    x = x_ref[0, 0]                       # scalar read from SMEM, no vector DMA
    y = x * w_ref[...] + b_ref[...]       # VPU broadcast FMA (no MXU)
    # clamp(., 0, 6) then * (1/6): the scale is a free constant VPU multiply.
    o_ref[...] = (jnp.clip(y, 0.0, 6.0) * (1.0 / 6.0)).astype(o_ref.dtype)


def pack_params(weight, bias):
    """One-time, init-time parameter layout (NOT in the per-call hot path).

    weight: (OUT, 1) f32, bias: (OUT,) f32  ->  (1, OUT) rows, f32.
    """
    out = weight.shape[0]
    w_row = jnp.asarray(weight, jnp.float32).reshape(1, out)
    b_row = jnp.asarray(bias, jnp.float32).reshape(1, out)
    return w_row, b_row


def linear_relu6_div6(x, w_row, b_row):
    """clamp(x @ W.T + b, 0, 6) / 6 for x: (1, 1), params pre-laid-out by pack_params."""
    B, IN = x.shape
    OUT = w_row.shape[1]
    assert B == 1 and IN == 1, "module spec is Linear(1 -> 8) with a (1, 1) input"

    return pl.pallas_call(
        _fused_linear_relu6_kernel,
        out_shape=jax.ShapeDtypeStruct((B, OUT), jnp.float32),
        grid=(),  # tiny problem: one invocation, whole-array blocks, no pipelining
        in_specs=[
            pl.BlockSpec(memory_space=pltpu.MemorySpace.SMEM),  # x scalar
            pl.BlockSpec(memory_space=pltpu.MemorySpace.VMEM),  # weight row
            pl.BlockSpec(memory_space=pltpu.MemorySpace.VMEM),  # bias row
        ],
        out_specs=pl.BlockSpec(memory_space=pltpu.MemorySpace.VMEM),
        compiler_params=pltpu.CompilerParams(
            vmem_limit_bytes=4 * 1024 * 1024,
        ),
    )(x, w_row, b_row)


if __name__ == "__main__":
    key = jax.random.PRNGKey(0)
    kx, kw, kb = jax.random.split(key, 3)

    # Module shapes: Linear(1 -> 8, bias=True); input is (1, 1).
    B, IN, OUT = 1, 1, 8
    x = jax.random.normal(kx, (B, IN), dtype=jnp.float32)
    # PyTorch-style uniform(-1/sqrt(IN), 1/sqrt(IN)) init.
    bound = 1.0 / (IN ** 0.5)
    weight = jax.random.uniform(kw, (OUT, IN), jnp.float32, -bound, bound)
    bias = jax.random.uniform(kb, (OUT,), jnp.float32, -bound, bound)

    # Init-time layout (done once); the per-call path is just the pallas_call.
    w_row, b_row = pack_params(weight, bias)
    jax.block_until_ready((w_row, b_row))

    out = linear_relu6_div6(x, w_row, b_row)
    jax.block_until_ready(out)

    # Reference in plain JAX, matching the intended PyTorch forward.
    ref = jnp.clip(x @ weight.T + bias[None, :], 0.0, 6.0) / 6.0
    assert out.shape == (B, OUT)
    assert jnp.allclose(out, ref, atol=1e-6), (out, ref)

    print("KERNEL_OK")
</pallas_src>

<mosaic_0001>
module attributes {stable_mosaic.version = 11 : i64} {
  func.func @_fused_linear_relu6_kernel(%arg0: memref<1x1xf32, #tpu.memory_space<smem>>, %arg1: memref<1x8xf32, #tpu.memory_space<vmem>>, %arg2: memref<1x8xf32, #tpu.memory_space<vmem>>, %arg3: memref<1x8xf32, #tpu.memory_space<vmem>>) attributes {dimension_semantics = [], scalar_prefetch = 0 : i64, scratch_operands = 0 : i64, tpu.core_type = #tpu.core_type<tc>} {
    %c0 = arith.constant 0 : index
    %c0_0 = arith.constant 0 : index
    %0 = memref.load %arg0[%c0, %c0_0] : memref<1x1xf32, #tpu.memory_space<smem>>
    %c0_1 = arith.constant 0 : index
    %c0_2 = arith.constant 0 : index
    %1 = vector.load %arg1[%c0_1, %c0_2] : memref<1x8xf32, #tpu.memory_space<vmem>>, vector<1x8xf32>
    %2 = vector.broadcast %0 : f32 to vector<1x8xf32>
    %3 = arith.mulf %2, %1 : vector<1x8xf32>
    %c0_3 = arith.constant 0 : index
    %c0_4 = arith.constant 0 : index
    %4 = vector.load %arg2[%c0_3, %c0_4] : memref<1x8xf32, #tpu.memory_space<vmem>>, vector<1x8xf32>
    %5 = arith.addf %3, %4 : vector<1x8xf32>
    %cst = arith.constant 0.000000e+00 : f32
    %cst_5 = arith.constant 6.000000e+00 : f32
    %6 = vector.broadcast %cst : f32 to vector<1x8xf32>
    %7 = arith.maximumf %6, %5 : vector<1x8xf32>
    %8 = vector.broadcast %cst_5 : f32 to vector<1x8xf32>
    %9 = arith.minimumf %8, %7 : vector<1x8xf32>
    %cst_6 = arith.constant 0.166666672 : f32
    %10 = vector.broadcast %cst_6 : f32 to vector<1x8xf32>
    %11 = arith.mulf %9, %10 : vector<1x8xf32>
    %c0_7 = arith.constant 0 : index
    %c0_8 = arith.constant 0 : index
    %12 = vector.load %arg3[%c0_7, %c0_8] : memref<1x8xf32, #tpu.memory_space<vmem>>, vector<1x8xf32>
    tpu.vector_store %arg3[%c0_7, %c0_8], %11 {strides = array<i32>} : memref<1x8xf32, #tpu.memory_space<vmem>>, vector<1x8xf32>,
    return
  }
}

</mosaic_0001>

<llo_original>
// kernel: tpu_custom_call.1
$region0: #{tpu_custom_call.1}
  #allocation0 [shape = 'u32[]', space=smem, size = 0x4, offset = 0x4, fixed_abs, tag = 'smem constant byte address 0x4 - core index']
  #allocation1 [shape = 'u32[144,128]{1,0:T(1,128)}', space=vmem, size = 0x12000, scoped, tag = 'internal scratch']
  #allocation2 [shape = 'f32[1,1]{1,0:T(1,128)S(6)}', space=smem, size = 0x200, scoped, tag = 'scoped memory for tpu_custom_call.1']
  %s0 = inlined_call_operand.<no memory space> [shape: f32[1,1], index: 0, kind: input, shape index: {}]
  %s1 = inlined_call_operand.vmem [shape: f32[1,8], index: 1, kind: input, shape index: {}]
  %s2 = inlined_call_operand.vmem [shape: f32[1,8], index: 2, kind: input, shape index: {}]
  %s3 = inlined_call_operand.hbm [shape: f32[1,8], index: 3, kind: output, shape index: {}]
  %s4 = sld [smem:[#allocation0]]
  $region22: #{tpu_custom_call.1} parent=0
    _
  %s6 = ssub.s32 1, %s4
  %s7 = scalar_select 0, %s6, %s4
  %8 = sst [smem:[#allocation2]] %s0
  $region1: #{tpu_custom_call.1} parent=0
    #allocation3 [shape = 'u8[512]{0}', space=vmem, size = 0x400, scoped, tag = 'output window, operand 0, single buffered']
    #allocation4 [shape = 's32[1]{0}', space=sflag, size = 0x4, scoped, tag = 'scoped memory for tpu_custom_call.1']
    %9 = vsyncpa [#allocation4], 0
    // Predicated region
    $region2: #{tpu_custom_call.1} parent=1 // pred_check
      _
    $region3: #{tpu_custom_call.1} parent=1 // pred_check_branch
      %11 = sbr.rel (0) target = $region5
    $region4: #{tpu_custom_call.1} parent=1 // pred_region
      _
    $region5: #{tpu_custom_call.1} parent=1 // pred_fallthru
      _
    // Predicated region
    $region6: #{tpu_custom_call.1} parent=1 // pred_check
      _
    $region7: #{tpu_custom_call.1} parent=1 // pred_check_branch
      %13 = sbr.rel (0) target = $region9
    $region8: #{tpu_custom_call.1} parent=1 // pred_region
      _
    $region9: #{tpu_custom_call.1} parent=1 // pred_fallthru
      _
    // Predicated region
    $region10: #{tpu_custom_call.1} parent=1 // pred_check
      _
    $region11: #{tpu_custom_call.1} parent=1 // pred_check_branch
      %15 = sbr.rel (0) target = $region13
    $region12: #{tpu_custom_call.1} parent=1 // pred_region
      _
    $region13: #{tpu_custom_call.1} parent=1 // pred_fallthru
      _
    %s16 = sld [smem:[#allocation2]]
    %v17 = vld [vmem:[%s1] sm:$0x1]
    %v18 = vstv %s16
    %v19 = vmul.f32 %v18, %v17
    %v20 = vld [vmem:[%s2] sm:$0x1]
    %v21 = vadd.f32 %v19, %v20
    %v22 = vmax.f32 %v21, 0.0
    %v23 = vmin.f32 %v22, 6.0
    %v24 = vmul.f32 %v23, 0.16666667
    %vm25 = vcmask 57344
    %26 = vst.msk [vmem:[#allocation3] sm:$0x1] %vm25, %v24
    // Predicated region
    $region14: #{tpu_custom_call.1} parent=1 // pred_check
      _
    $region15: #{tpu_custom_call.1} parent=1 // pred_check_branch
      %28 = sbr.rel (0) target = $region17
    $region16: #{tpu_custom_call.1} parent=1 // pred_region
      %s30 = ssub.s32 16, 16
      %31 = vsyncadd [#allocation4], %s30
      %s33 = sshll.u32 [#allocation3], 4
      %s34 = int_to_ptr.vmem [resolvable:$true] %s33
      %36 = dma.vmem_to_hbm [thread:$0]  %s34, 16, %s3, [#allocation4]
    $region17: #{tpu_custom_call.1} parent=1 // pred_fallthru
      _
    // Predicated region
    $region18: #{tpu_custom_call.1} parent=1 // pred_check
      _
    $region19: #{tpu_custom_call.1} parent=1 // pred_check_branch
      %38 = sbr.rel (0) target = $region21
    $region20: #{tpu_custom_call.1} parent=1 // pred_region
      %39 = dma.done [#allocation4], 16
    $region21: #{tpu_custom_call.1} parent=1 // pred_fallthru
      _
    %40 = vsyncpa [#allocation4], 1

</llo_original>
